<compile_context>
chip_gen: v5e
topology: v5e:2x2
jax: 0.10.0
libtpu: 0.0.40
codegen_flags: <defaults>
</compile_context>

<pallas_src>
import functools

import jax
import jax.numpy as jnp
from jax.experimental import pallas as pl
from jax.experimental.pallas import tpu as pltpu


def _round_up(x, m):
    return ((x + m - 1) // m) * m


def _sigmoid(x):
    # Single EUP op (tanh) instead of exp + reciprocal.
    return 0.5 * jnp.tanh(0.5 * x) + 0.5


def _dense_sigmoid(rows, w, b):
    """out[j] = sigmoid(b[j] + sum_i w[i][j] * rows[i]).

    `rows` is a list of (CH, 128) arrays (batch on sublanes+lanes); `w`/`b` are
    nested lists of hoisted SMEM scalars -> pure VPU broadcast multiply-adds.
    """
    n_in = len(w)
    n_out = len(b)
    outs = []
    for j in range(n_out):
        acc = rows[0] * w[0][j]
        for i in range(1, n_in):
            acc = acc + rows[i] * w[i][j]
        outs.append(_sigmoid(acc + b[j]))
    return outs


def mlp_kernel(w1_ref, b1_ref, w2_ref, b2_ref, w3_ref, b3_ref,
               x_ref, o_ref, *, chunk_rows):
    # x_ref: (8, TR, 128) VMEM block (feature, sublane-block, lane); o_ref: (TR, 128).
    tr = x_ref.shape[1]
    n_chunks = tr // chunk_rows

    # Hoist all 87 weight/bias scalars out of the chunk loop (read once per step).
    w1 = [[w1_ref[i, j] for j in range(6)] for i in range(8)]
    b1 = [b1_ref[0, j] for j in range(6)]
    w2 = [[w2_ref[i, j] for j in range(4)] for i in range(6)]
    b2 = [b2_ref[0, j] for j in range(4)]
    w3 = [[w3_ref[i, 0]] for i in range(4)]
    b3 = [b3_ref[0, 0]]

    @pl.loop(0, n_chunks)
    def _(c):
        r0 = pl.multiple_of(c * chunk_rows, chunk_rows)
        xs = [x_ref[i, pl.ds(r0, chunk_rows), :] for i in range(8)]   # 8 x (CH, 128)
        h1 = _dense_sigmoid(xs, w1, b1)                               # 6 x (CH, 128)
        h2 = _dense_sigmoid(h1, w2, b2)                               # 4 x (CH, 128)
        y = _dense_sigmoid(h2, w3, b3)                                # 1 x (CH, 128)
        o_ref[pl.ds(r0, chunk_rows), :] = y[0]


def mlp_forward(x, params, *, tile_batch=262144, chunk_rows=16):
    """x: (N, 8) float32 (PyTorch Linear layout). Returns (N, 1)."""
    (w1, b1), (w2, b2), (w3, b3) = params
    n = x.shape[0]
    lane = 128
    ch = chunk_rows

    # Pad the batch only to one sublane-chunk (<= ch*128-1 wasted columns),
    # never to a full tile multiple.
    n_pad = _round_up(max(n, 1), ch * lane)
    nb = n_pad // lane                       # number of 128-wide batch blocks (mult of ch)

    # Tile rows per grid step. Cap at 4096 so the double-buffered footprint
    # (~18 * TR * 512 B) stays well under v7x's 64 MiB per-TC VMEM.
    tr = max(ch, min(tile_batch // lane, 4096))
    tr = (tr // ch) * ch
    tr = min(tr, nb)
    grid = (pl.cdiv(nb, tr),)

    # Feature-major relayout: one fused XLA transpose+pad; the reshape is free.
    xt = jnp.zeros((8, n_pad), jnp.float32).at[:, :n].set(
        x.astype(jnp.float32).T).reshape(8, nb, lane)

    smem = pl.BlockSpec(memory_space=pltpu.MemorySpace.SMEM)   # resident params
    kernel = functools.partial(mlp_kernel, chunk_rows=ch)

    out = pl.pallas_call(
        kernel,
        out_shape=jax.ShapeDtypeStruct((nb, lane), jnp.float32),
        grid=grid,
        in_specs=[smem] * 6 + [pl.BlockSpec((8, tr, lane), lambda i: (0, i, 0))],
        out_specs=pl.BlockSpec((tr, lane), lambda i: (i, 0)),
        compiler_params=pltpu.CompilerParams(
            dimension_semantics=("parallel",),      # v7x: split batch across 2 TCs
            vmem_limit_bytes=48 * 1024 * 1024,      # <= v7x 64 MiB physical VMEM
        ),
    )(w1, b1, w2, b2, w3, b3, xt)

    return out.reshape(n_pad)[:n].reshape(n, 1)


def init_params(key):
    # Mirrors Linear(8,6), Linear(6,4), Linear(4,1); weights stored (in, out),
    # biases (1, out), so y = x @ W + b.
    k1, k2, k3, k4, k5, k6 = jax.random.split(key, 6)
    w1 = jax.random.normal(k1, (8, 6), jnp.float32) * 0.5
    b1 = jax.random.normal(k2, (1, 6), jnp.float32) * 0.1
    w2 = jax.random.normal(k3, (6, 4), jnp.float32) * 0.5
    b2 = jax.random.normal(k4, (1, 4), jnp.float32) * 0.1
    w3 = jax.random.normal(k5, (4, 1), jnp.float32) * 0.5
    b3 = jax.random.normal(k6, (1, 1), jnp.float32) * 0.1
    return ((w1, b1), (w2, b2), (w3, b3))


def reference_forward(x, params):
    (w1, b1), (w2, b2), (w3, b3) = params
    h1 = jax.nn.sigmoid(x @ w1 + b1)
    h2 = jax.nn.sigmoid(h1 @ w2 + b2)
    return jax.nn.sigmoid(h2 @ w3 + b3)


if __name__ == "__main__":
    key = jax.random.PRNGKey(0)
    kx, kx2, kp = jax.random.split(key, 3)
    params = init_params(kp)

    # Small example matching the module's interface: batch=8, in_features=8.
    x = jax.random.normal(kx, (8, 8), jnp.float32)
    out = mlp_forward(x, params)
    jax.block_until_ready(out)
    ref = reference_forward(x, params)
    assert out.shape == (8, 1), out.shape
    assert jnp.allclose(out, ref, atol=1e-5, rtol=1e-5), "mismatch vs reference (N=8)"

    # Exercise a multi-step grid with a partial boundary block:
    # N=5000 -> n_pad=6144 -> nb=48 sublane blocks; tile_batch=4096 -> TR=32 -> grid=2
    # (second block only half valid), plus the in-kernel chunk loop (2 chunks/step).
    x2 = jax.random.normal(kx2, (5000, 8), jnp.float32)
    out2 = mlp_forward(x2, params, tile_batch=4096)
    jax.block_until_ready(out2)
    ref2 = reference_forward(x2, params)
    assert out2.shape == (5000, 1), out2.shape
    assert jnp.allclose(out2, ref2, atol=1e-5, rtol=1e-5), "mismatch vs reference (N=5000)"

    print("KERNEL_OK")
</pallas_src>

<mosaic_0001>
module attributes {stable_mosaic.version = 11 : i64} {
  func.func @mlp_kernel(%arg0: i32, %arg1: memref<8x6xf32, #tpu.memory_space<smem>>, %arg2: memref<1x6xf32, #tpu.memory_space<smem>>, %arg3: memref<6x4xf32, #tpu.memory_space<smem>>, %arg4: memref<1x4xf32, #tpu.memory_space<smem>>, %arg5: memref<4x1xf32, #tpu.memory_space<smem>>, %arg6: memref<1x1xf32, #tpu.memory_space<smem>>, %arg7: memref<8x16x128xf32, #tpu.memory_space<vmem>>, %arg8: memref<16x128xf32, #tpu.memory_space<vmem>>) attributes {dimension_semantics = [#tpu.dimension_semantics<parallel>], iteration_bounds = array<i64: 1>, scalar_prefetch = 0 : i64, scratch_operands = 0 : i64, tpu.core_type = #tpu.core_type<tc>, window_params = [{transform_indices = @transform_0, window_bounds = array<i64: 8, 6>}, {transform_indices = @transform_1, window_bounds = array<i64: 1, 6>}, {transform_indices = @transform_2, window_bounds = array<i64: 6, 4>}, {transform_indices = @transform_3, window_bounds = array<i64: 1, 4>}, {transform_indices = @transform_4, window_bounds = array<i64: 4, 1>}, {transform_indices = @transform_5, window_bounds = array<i64: 1, 1>}, {transform_indices = @transform_6, window_bounds = array<i64: 8, 16, 128>}, {transform_indices = @transform_7, window_bounds = array<i64: 16, 128>}]} {
    %c0 = arith.constant 0 : index
    %c0_0 = arith.constant 0 : index
    %0 = memref.load %arg1[%c0, %c0_0] : memref<8x6xf32, #tpu.memory_space<smem>>
    %c0_1 = arith.constant 0 : index
    %c1 = arith.constant 1 : index
    %1 = memref.load %arg1[%c0_1, %c1] : memref<8x6xf32, #tpu.memory_space<smem>>
    %c0_2 = arith.constant 0 : index
    %c2 = arith.constant 2 : index
    %2 = memref.load %arg1[%c0_2, %c2] : memref<8x6xf32, #tpu.memory_space<smem>>
    %c0_3 = arith.constant 0 : index
    %c3 = arith.constant 3 : index
    %3 = memref.load %arg1[%c0_3, %c3] : memref<8x6xf32, #tpu.memory_space<smem>>
    %c0_4 = arith.constant 0 : index
    %c4 = arith.constant 4 : index
    %4 = memref.load %arg1[%c0_4, %c4] : memref<8x6xf32, #tpu.memory_space<smem>>
    %c0_5 = arith.constant 0 : index
    %c5 = arith.constant 5 : index
    %5 = memref.load %arg1[%c0_5, %c5] : memref<8x6xf32, #tpu.memory_space<smem>>
    %c1_6 = arith.constant 1 : index
    %c0_7 = arith.constant 0 : index
    %6 = memref.load %arg1[%c1_6, %c0_7] : memref<8x6xf32, #tpu.memory_space<smem>>
    %c1_8 = arith.constant 1 : index
    %c1_9 = arith.constant 1 : index
    %7 = memref.load %arg1[%c1_8, %c1_9] : memref<8x6xf32, #tpu.memory_space<smem>>
    %c1_10 = arith.constant 1 : index
    %c2_11 = arith.constant 2 : index
    %8 = memref.load %arg1[%c1_10, %c2_11] : memref<8x6xf32, #tpu.memory_space<smem>>
    %c1_12 = arith.constant 1 : index
    %c3_13 = arith.constant 3 : index
    %9 = memref.load %arg1[%c1_12, %c3_13] : memref<8x6xf32, #tpu.memory_space<smem>>
    %c1_14 = arith.constant 1 : index
    %c4_15 = arith.constant 4 : index
    %10 = memref.load %arg1[%c1_14, %c4_15] : memref<8x6xf32, #tpu.memory_space<smem>>
    %c1_16 = arith.constant 1 : index
    %c5_17 = arith.constant 5 : index
    %11 = memref.load %arg1[%c1_16, %c5_17] : memref<8x6xf32, #tpu.memory_space<smem>>
    %c2_18 = arith.constant 2 : index
    %c0_19 = arith.constant 0 : index
    %12 = memref.load %arg1[%c2_18, %c0_19] : memref<8x6xf32, #tpu.memory_space<smem>>
    %c2_20 = arith.constant 2 : index
    %c1_21 = arith.constant 1 : index
    %13 = memref.load %arg1[%c2_20, %c1_21] : memref<8x6xf32, #tpu.memory_space<smem>>
    %c2_22 = arith.constant 2 : index
    %c2_23 = arith.constant 2 : index
    %14 = memref.load %arg1[%c2_22, %c2_23] : memref<8x6xf32, #tpu.memory_space<smem>>
    %c2_24 = arith.constant 2 : index
    %c3_25 = arith.constant 3 : index
    %15 = memref.load %arg1[%c2_24, %c3_25] : memref<8x6xf32, #tpu.memory_space<smem>>
    %c2_26 = arith.constant 2 : index
    %c4_27 = arith.constant 4 : index
    %16 = memref.load %arg1[%c2_26, %c4_27] : memref<8x6xf32, #tpu.memory_space<smem>>
    %c2_28 = arith.constant 2 : index
    %c5_29 = arith.constant 5 : index
    %17 = memref.load %arg1[%c2_28, %c5_29] : memref<8x6xf32, #tpu.memory_space<smem>>
    %c3_30 = arith.constant 3 : index
    %c0_31 = arith.constant 0 : index
    %18 = memref.load %arg1[%c3_30, %c0_31] : memref<8x6xf32, #tpu.memory_space<smem>>
    %c3_32 = arith.constant 3 : index
    %c1_33 = arith.constant 1 : index
    %19 = memref.load %arg1[%c3_32, %c1_33] : memref<8x6xf32, #tpu.memory_space<smem>>
    %c3_34 = arith.constant 3 : index
    %c2_35 = arith.constant 2 : index
    %20 = memref.load %arg1[%c3_34, %c2_35] : memref<8x6xf32, #tpu.memory_space<smem>>
    %c3_36 = arith.constant 3 : index
    %c3_37 = arith.constant 3 : index
    %21 = memref.load %arg1[%c3_36, %c3_37] : memref<8x6xf32, #tpu.memory_space<smem>>
    %c3_38 = arith.constant 3 : index
    %c4_39 = arith.constant 4 : index
    %22 = memref.load %arg1[%c3_38, %c4_39] : memref<8x6xf32, #tpu.memory_space<smem>>
    %c3_40 = arith.constant 3 : index
    %c5_41 = arith.constant 5 : index
    %23 = memref.load %arg1[%c3_40, %c5_41] : memref<8x6xf32, #tpu.memory_space<smem>>
    %c4_42 = arith.constant 4 : index
    %c0_43 = arith.constant 0 : index
    %24 = memref.load %arg1[%c4_42, %c0_43] : memref<8x6xf32, #tpu.memory_space<smem>>
    %c4_44 = arith.constant 4 : index
    %c1_45 = arith.constant 1 : index
    %25 = memref.load %arg1[%c4_44, %c1_45] : memref<8x6xf32, #tpu.memory_space<smem>>
    %c4_46 = arith.constant 4 : index
    %c2_47 = arith.constant 2 : index
    %26 = memref.load %arg1[%c4_46, %c2_47] : memref<8x6xf32, #tpu.memory_space<smem>>
    %c4_48 = arith.constant 4 : index
    %c3_49 = arith.constant 3 : index
    %27 = memref.load %arg1[%c4_48, %c3_49] : memref<8x6xf32, #tpu.memory_space<smem>>
    %c4_50 = arith.constant 4 : index
    %c4_51 = arith.constant 4 : index
    %28 = memref.load %arg1[%c4_50, %c4_51] : memref<8x6xf32, #tpu.memory_space<smem>>
    %c4_52 = arith.constant 4 : index
    %c5_53 = arith.constant 5 : index
    %29 = memref.load %arg1[%c4_52, %c5_53] : memref<8x6xf32, #tpu.memory_space<smem>>
    %c5_54 = arith.constant 5 : index
    %c0_55 = arith.constant 0 : index
    %30 = memref.load %arg1[%c5_54, %c0_55] : memref<8x6xf32, #tpu.memory_space<smem>>
    %c5_56 = arith.constant 5 : index
    %c1_57 = arith.constant 1 : index
    %31 = memref.load %arg1[%c5_56, %c1_57] : memref<8x6xf32, #tpu.memory_space<smem>>
    %c5_58 = arith.constant 5 : index
    %c2_59 = arith.constant 2 : index
    %32 = memref.load %arg1[%c5_58, %c2_59] : memref<8x6xf32, #tpu.memory_space<smem>>
    %c5_60 = arith.constant 5 : index
    %c3_61 = arith.constant 3 : index
    %33 = memref.load %arg1[%c5_60, %c3_61] : memref<8x6xf32, #tpu.memory_space<smem>>
    %c5_62 = arith.constant 5 : index
    %c4_63 = arith.constant 4 : index
    %34 = memref.load %arg1[%c5_62, %c4_63] : memref<8x6xf32, #tpu.memory_space<smem>>
    %c5_64 = arith.constant 5 : index
    %c5_65 = arith.constant 5 : index
    %35 = memref.load %arg1[%c5_64, %c5_65] : memref<8x6xf32, #tpu.memory_space<smem>>
    %c6 = arith.constant 6 : index
    %c0_66 = arith.constant 0 : index
    %36 = memref.load %arg1[%c6, %c0_66] : memref<8x6xf32, #tpu.memory_space<smem>>
    %c6_67 = arith.constant 6 : index
    %c1_68 = arith.constant 1 : index
    %37 = memref.load %arg1[%c6_67, %c1_68] : memref<8x6xf32, #tpu.memory_space<smem>>
    %c6_69 = arith.constant 6 : index
    %c2_70 = arith.constant 2 : index
    %38 = memref.load %arg1[%c6_69, %c2_70] : memref<8x6xf32, #tpu.memory_space<smem>>
    %c6_71 = arith.constant 6 : index
    %c3_72 = arith.constant 3 : index
    %39 = memref.load %arg1[%c6_71, %c3_72] : memref<8x6xf32, #tpu.memory_space<smem>>
    %c6_73 = arith.constant 6 : index
    %c4_74 = arith.constant 4 : index
    %40 = memref.load %arg1[%c6_73, %c4_74] : memref<8x6xf32, #tpu.memory_space<smem>>
    %c6_75 = arith.constant 6 : index
    %c5_76 = arith.constant 5 : index
    %41 = memref.load %arg1[%c6_75, %c5_76] : memref<8x6xf32, #tpu.memory_space<smem>>
    %c7 = arith.constant 7 : index
    %c0_77 = arith.constant 0 : index
    %42 = memref.load %arg1[%c7, %c0_77] : memref<8x6xf32, #tpu.memory_space<smem>>
    %c7_78 = arith.constant 7 : index
    %c1_79 = arith.constant 1 : index
    %43 = memref.load %arg1[%c7_78, %c1_79] : memref<8x6xf32, #tpu.memory_space<smem>>
    %c7_80 = arith.constant 7 : index
    %c2_81 = arith.constant 2 : index
    %44 = memref.load %arg1[%c7_80, %c2_81] : memref<8x6xf32, #tpu.memory_space<smem>>
    %c7_82 = arith.constant 7 : index
    %c3_83 = arith.constant 3 : index
    %45 = memref.load %arg1[%c7_82, %c3_83] : memref<8x6xf32, #tpu.memory_space<smem>>
    %c7_84 = arith.constant 7 : index
    %c4_85 = arith.constant 4 : index
    %46 = memref.load %arg1[%c7_84, %c4_85] : memref<8x6xf32, #tpu.memory_space<smem>>
    %c7_86 = arith.constant 7 : index
    %c5_87 = arith.constant 5 : index
    %47 = memref.load %arg1[%c7_86, %c5_87] : memref<8x6xf32, #tpu.memory_space<smem>>
    %c0_88 = arith.constant 0 : index
    %c0_89 = arith.constant 0 : index
    %48 = memref.load %arg2[%c0_88, %c0_89] : memref<1x6xf32, #tpu.memory_space<smem>>
    %c0_90 = arith.constant 0 : index
    %c1_91 = arith.constant 1 : index
    %49 = memref.load %arg2[%c0_90, %c1_91] : memref<1x6xf32, #tpu.memory_space<smem>>
    %c0_92 = arith.constant 0 : index
    %c2_93 = arith.constant 2 : index
    %50 = memref.load %arg2[%c0_92, %c2_93] : memref<1x6xf32, #tpu.memory_space<smem>>
    %c0_94 = arith.constant 0 : index
    %c3_95 = arith.constant 3 : index
    %51 = memref.load %arg2[%c0_94, %c3_95] : memref<1x6xf32, #tpu.memory_space<smem>>
    %c0_96 = arith.constant 0 : index
    %c4_97 = arith.constant 4 : index
    %52 = memref.load %arg2[%c0_96, %c4_97] : memref<1x6xf32, #tpu.memory_space<smem>>
    %c0_98 = arith.constant 0 : index
    %c5_99 = arith.constant 5 : index
    %53 = memref.load %arg2[%c0_98, %c5_99] : memref<1x6xf32, #tpu.memory_space<smem>>
    %c0_100 = arith.constant 0 : index
    %c0_101 = arith.constant 0 : index
    %54 = memref.load %arg3[%c0_100, %c0_101] : memref<6x4xf32, #tpu.memory_space<smem>>
    %c0_102 = arith.constant 0 : index
    %c1_103 = arith.constant 1 : index
    %55 = memref.load %arg3[%c0_102, %c1_103] : memref<6x4xf32, #tpu.memory_space<smem>>
    %c0_104 = arith.constant 0 : index
    %c2_105 = arith.constant 2 : index
    %56 = memref.load %arg3[%c0_104, %c2_105] : memref<6x4xf32, #tpu.memory_space<smem>>
    %c0_106 = arith.constant 0 : index
    %c3_107 = arith.constant 3 : index
    %57 = memref.load %arg3[%c0_106, %c3_107] : memref<6x4xf32, #tpu.memory_space<smem>>
    %c1_108 = arith.constant 1 : index
    %c0_109 = arith.constant 0 : index
    %58 = memref.load %arg3[%c1_108, %c0_109] : memref<6x4xf32, #tpu.memory_space<smem>>
    %c1_110 = arith.constant 1 : index
    %c1_111 = arith.constant 1 : index
    %59 = memref.load %arg3[%c1_110, %c1_111] : memref<6x4xf32, #tpu.memory_space<smem>>
    %c1_112 = arith.constant 1 : index
    %c2_113 = arith.constant 2 : index
    %60 = memref.load %arg3[%c1_112, %c2_113] : memref<6x4xf32, #tpu.memory_space<smem>>
    %c1_114 = arith.constant 1 : index
    %c3_115 = arith.constant 3 : index
    %61 = memref.load %arg3[%c1_114, %c3_115] : memref<6x4xf32, #tpu.memory_space<smem>>
    %c2_116 = arith.constant 2 : index
    %c0_117 = arith.constant 0 : index
    %62 = memref.load %arg3[%c2_116, %c0_117] : memref<6x4xf32, #tpu.memory_space<smem>>
    %c2_118 = arith.constant 2 : index
    %c1_119 = arith.constant 1 : index
    %63 = memref.load %arg3[%c2_118, %c1_119] : memref<6x4xf32, #tpu.memory_space<smem>>
    %c2_120 = arith.constant 2 : index
    %c2_121 = arith.constant 2 : index
    %64 = memref.load %arg3[%c2_120, %c2_121] : memref<6x4xf32, #tpu.memory_space<smem>>
    %c2_122 = arith.constant 2 : index
    %c3_123 = arith.constant 3 : index
    %65 = memref.load %arg3[%c2_122, %c3_123] : memref<6x4xf32, #tpu.memory_space<smem>>
    %c3_124 = arith.constant 3 : index
    %c0_125 = arith.constant 0 : index
    %66 = memref.load %arg3[%c3_124, %c0_125] : memref<6x4xf32, #tpu.memory_space<smem>>
    %c3_126 = arith.constant 3 : index
    %c1_127 = arith.constant 1 : index
    %67 = memref.load %arg3[%c3_126, %c1_127] : memref<6x4xf32, #tpu.memory_space<smem>>
    %c3_128 = arith.constant 3 : index
    %c2_129 = arith.constant 2 : index
    %68 = memref.load %arg3[%c3_128, %c2_129] : memref<6x4xf32, #tpu.memory_space<smem>>
    %c3_130 = arith.constant 3 : index
    %c3_131 = arith.constant 3 : index
    %69 = memref.load %arg3[%c3_130, %c3_131] : memref<6x4xf32, #tpu.memory_space<smem>>
    %c4_132 = arith.constant 4 : index
    %c0_133 = arith.constant 0 : index
    %70 = memref.load %arg3[%c4_132, %c0_133] : memref<6x4xf32, #tpu.memory_space<smem>>
    %c4_134 = arith.constant 4 : index
    %c1_135 = arith.constant 1 : index
    %71 = memref.load %arg3[%c4_134, %c1_135] : memref<6x4xf32, #tpu.memory_space<smem>>
    %c4_136 = arith.constant 4 : index
    %c2_137 = arith.constant 2 : index
    %72 = memref.load %arg3[%c4_136, %c2_137] : memref<6x4xf32, #tpu.memory_space<smem>>
    %c4_138 = arith.constant 4 : index
    %c3_139 = arith.constant 3 : index
    %73 = memref.load %arg3[%c4_138, %c3_139] : memref<6x4xf32, #tpu.memory_space<smem>>
    %c5_140 = arith.constant 5 : index
    %c0_141 = arith.constant 0 : index
    %74 = memref.load %arg3[%c5_140, %c0_141] : memref<6x4xf32, #tpu.memory_space<smem>>
    %c5_142 = arith.constant 5 : index
    %c1_143 = arith.constant 1 : index
    %75 = memref.load %arg3[%c5_142, %c1_143] : memref<6x4xf32, #tpu.memory_space<smem>>
    %c5_144 = arith.constant 5 : index
    %c2_145 = arith.constant 2 : index
    %76 = memref.load %arg3[%c5_144, %c2_145] : memref<6x4xf32, #tpu.memory_space<smem>>
    %c5_146 = arith.constant 5 : index
    %c3_147 = arith.constant 3 : index
    %77 = memref.load %arg3[%c5_146, %c3_147] : memref<6x4xf32, #tpu.memory_space<smem>>
    %c0_148 = arith.constant 0 : index
    %c0_149 = arith.constant 0 : index
    %78 = memref.load %arg4[%c0_148, %c0_149] : memref<1x4xf32, #tpu.memory_space<smem>>
    %c0_150 = arith.constant 0 : index
    %c1_151 = arith.constant 1 : index
    %79 = memref.load %arg4[%c0_150, %c1_151] : memref<1x4xf32, #tpu.memory_space<smem>>
    %c0_152 = arith.constant 0 : index
    %c2_153 = arith.constant 2 : index
    %80 = memref.load %arg4[%c0_152, %c2_153] : memref<1x4xf32, #tpu.memory_space<smem>>
    %c0_154 = arith.constant 0 : index
    %c3_155 = arith.constant 3 : index
    %81 = memref.load %arg4[%c0_154, %c3_155] : memref<1x4xf32, #tpu.memory_space<smem>>
    %c0_156 = arith.constant 0 : index
    %c0_157 = arith.constant 0 : index
    %82 = memref.load %arg5[%c0_156, %c0_157] : memref<4x1xf32, #tpu.memory_space<smem>>
    %c1_158 = arith.constant 1 : index
    %c0_159 = arith.constant 0 : index
    %83 = memref.load %arg5[%c1_158, %c0_159] : memref<4x1xf32, #tpu.memory_space<smem>>
    %c2_160 = arith.constant 2 : index
    %c0_161 = arith.constant 0 : index
    %84 = memref.load %arg5[%c2_160, %c0_161] : memref<4x1xf32, #tpu.memory_space<smem>>
    %c3_162 = arith.constant 3 : index
    %c0_163 = arith.constant 0 : index
    %85 = memref.load %arg5[%c3_162, %c0_163] : memref<4x1xf32, #tpu.memory_space<smem>>
    %c0_164 = arith.constant 0 : index
    %c0_165 = arith.constant 0 : index
    %86 = memref.load %arg6[%c0_164, %c0_165] : memref<1x1xf32, #tpu.memory_space<smem>>
    %c0_i32 = arith.constant 0 : i32
    %c1_i32 = arith.constant 1 : i32
    %87 = arith.muli %c0_i32, %c1_i32 : i32
    %c0_i32_166 = arith.constant 0 : i32
    %88 = arith.addi %c0_i32_166, %87 : i32
    %c16_i32 = arith.constant 16 : i32
    %89 = arith.muli %88, %c16_i32 : i32
    %90 = tpu.assume_multiple %89, 16 : i32
    %c0_167 = arith.constant 0 : index
    %91 = arith.index_cast %90 : i32 to index
    %c0_168 = arith.constant 0 : index
    %92 = vector.load %arg7[%c0_167, %91, %c0_168] : memref<8x16x128xf32, #tpu.memory_space<vmem>>, vector<1x16x128xf32>
    %93 = vector.shape_cast %92 : vector<1x16x128xf32> to vector<16x128xf32>
    %c1_169 = arith.constant 1 : index
    %94 = arith.index_cast %90 : i32 to index
    %c0_170 = arith.constant 0 : index
    %95 = vector.load %arg7[%c1_169, %94, %c0_170] : memref<8x16x128xf32, #tpu.memory_space<vmem>>, vector<1x16x128xf32>
    %96 = vector.shape_cast %95 : vector<1x16x128xf32> to vector<16x128xf32>
    %c2_171 = arith.constant 2 : index
    %97 = arith.index_cast %90 : i32 to index
    %c0_172 = arith.constant 0 : index
    %98 = vector.load %arg7[%c2_171, %97, %c0_172] : memref<8x16x128xf32, #tpu.memory_space<vmem>>, vector<1x16x128xf32>
    %99 = vector.shape_cast %98 : vector<1x16x128xf32> to vector<16x128xf32>
    %c3_173 = arith.constant 3 : index
    %100 = arith.index_cast %90 : i32 to index
    %c0_174 = arith.constant 0 : index
    %101 = vector.load %arg7[%c3_173, %100, %c0_174] : memref<8x16x128xf32, #tpu.memory_space<vmem>>, vector<1x16x128xf32>
    %102 = vector.shape_cast %101 : vector<1x16x128xf32> to vector<16x128xf32>
    %c4_175 = arith.constant 4 : index
    %103 = arith.index_cast %90 : i32 to index
    %c0_176 = arith.constant 0 : index
    %104 = vector.load %arg7[%c4_175, %103, %c0_176] : memref<8x16x128xf32, #tpu.memory_space<vmem>>, vector<1x16x128xf32>
    %105 = vector.shape_cast %104 : vector<1x16x128xf32> to vector<16x128xf32>
    %c5_177 = arith.constant 5 : index
    %106 = arith.index_cast %90 : i32 to index
    %c0_178 = arith.constant 0 : index
    %107 = vector.load %arg7[%c5_177, %106, %c0_178] : memref<8x16x128xf32, #tpu.memory_space<vmem>>, vector<1x16x128xf32>
    %108 = vector.shape_cast %107 : vector<1x16x128xf32> to vector<16x128xf32>
    %c6_179 = arith.constant 6 : index
    %109 = arith.index_cast %90 : i32 to index
    %c0_180 = arith.constant 0 : index
    %110 = vector.load %arg7[%c6_179, %109, %c0_180] : memref<8x16x128xf32, #tpu.memory_space<vmem>>, vector<1x16x128xf32>
    %111 = vector.shape_cast %110 : vector<1x16x128xf32> to vector<16x128xf32>
    %c7_181 = arith.constant 7 : index
    %112 = arith.index_cast %90 : i32 to index
    %c0_182 = arith.constant 0 : index
    %113 = vector.load %arg7[%c7_181, %112, %c0_182] : memref<8x16x128xf32, #tpu.memory_space<vmem>>, vector<1x16x128xf32>
    %114 = vector.shape_cast %113 : vector<1x16x128xf32> to vector<16x128xf32>
    %115 = vector.broadcast %0 : f32 to vector<16x128xf32>
    %116 = arith.mulf %93, %115 : vector<16x128xf32>
    %117 = vector.broadcast %6 : f32 to vector<16x128xf32>
    %118 = arith.mulf %96, %117 : vector<16x128xf32>
    %119 = arith.addf %116, %118 : vector<16x128xf32>
    %120 = vector.broadcast %12 : f32 to vector<16x128xf32>
    %121 = arith.mulf %99, %120 : vector<16x128xf32>
    %122 = arith.addf %119, %121 : vector<16x128xf32>
    %123 = vector.broadcast %18 : f32 to vector<16x128xf32>
    %124 = arith.mulf %102, %123 : vector<16x128xf32>
    %125 = arith.addf %122, %124 : vector<16x128xf32>
    %126 = vector.broadcast %24 : f32 to vector<16x128xf32>
    %127 = arith.mulf %105, %126 : vector<16x128xf32>
    %128 = arith.addf %125, %127 : vector<16x128xf32>
    %129 = vector.broadcast %30 : f32 to vector<16x128xf32>
    %130 = arith.mulf %108, %129 : vector<16x128xf32>
    %131 = arith.addf %128, %130 : vector<16x128xf32>
    %132 = vector.broadcast %36 : f32 to vector<16x128xf32>
    %133 = arith.mulf %111, %132 : vector<16x128xf32>
    %134 = arith.addf %131, %133 : vector<16x128xf32>
    %135 = vector.broadcast %42 : f32 to vector<16x128xf32>
    %136 = arith.mulf %114, %135 : vector<16x128xf32>
    %137 = arith.addf %134, %136 : vector<16x128xf32>
    %138 = vector.broadcast %48 : f32 to vector<16x128xf32>
    %139 = arith.addf %137, %138 : vector<16x128xf32>
    %cst = arith.constant 5.000000e-01 : f32
    %140 = vector.broadcast %cst : f32 to vector<16x128xf32>
    %141 = arith.mulf %140, %139 : vector<16x128xf32>
    %142 = math.tanh %141 : vector<16x128xf32>
    %cst_183 = arith.constant 5.000000e-01 : f32
    %143 = vector.broadcast %cst_183 : f32 to vector<16x128xf32>
    %144 = arith.mulf %143, %142 : vector<16x128xf32>
    %cst_184 = arith.constant 5.000000e-01 : f32
    %145 = vector.broadcast %cst_184 : f32 to vector<16x128xf32>
    %146 = arith.addf %144, %145 : vector<16x128xf32>
    %147 = vector.broadcast %1 : f32 to vector<16x128xf32>
    %148 = arith.mulf %93, %147 : vector<16x128xf32>
    %149 = vector.broadcast %7 : f32 to vector<16x128xf32>
    %150 = arith.mulf %96, %149 : vector<16x128xf32>
    %151 = arith.addf %148, %150 : vector<16x128xf32>
    %152 = vector.broadcast %13 : f32 to vector<16x128xf32>
    %153 = arith.mulf %99, %152 : vector<16x128xf32>
    %154 = arith.addf %151, %153 : vector<16x128xf32>
    %155 = vector.broadcast %19 : f32 to vector<16x128xf32>
    %156 = arith.mulf %102, %155 : vector<16x128xf32>
    %157 = arith.addf %154, %156 : vector<16x128xf32>
    %158 = vector.broadcast %25 : f32 to vector<16x128xf32>
    %159 = arith.mulf %105, %158 : vector<16x128xf32>
    %160 = arith.addf %157, %159 : vector<16x128xf32>
    %161 = vector.broadcast %31 : f32 to vector<16x128xf32>
    %162 = arith.mulf %108, %161 : vector<16x128xf32>
    %163 = arith.addf %160, %162 : vector<16x128xf32>
    %164 = vector.broadcast %37 : f32 to vector<16x128xf32>
    %165 = arith.mulf %111, %164 : vector<16x128xf32>
    %166 = arith.addf %163, %165 : vector<16x128xf32>
    %167 = vector.broadcast %43 : f32 to vector<16x128xf32>
    %168 = arith.mulf %114, %167 : vector<16x128xf32>
    %169 = arith.addf %166, %168 : vector<16x128xf32>
    %170 = vector.broadcast %49 : f32 to vector<16x128xf32>
    %171 = arith.addf %169, %170 : vector<16x128xf32>
    %cst_185 = arith.constant 5.000000e-01 : f32
    %172 = vector.broadcast %cst_185 : f32 to vector<16x128xf32>
    %173 = arith.mulf %172, %171 : vector<16x128xf32>
    %174 = math.tanh %173 : vector<16x128xf32>
    %cst_186 = arith.constant 5.000000e-01 : f32
    %175 = vector.broadcast %cst_186 : f32 to vector<16x128xf32>
    %176 = arith.mulf %175, %174 : vector<16x128xf32>
    %cst_187 = arith.constant 5.000000e-01 : f32
    %177 = vector.broadcast %cst_187 : f32 to vector<16x128xf32>
    %178 = arith.addf %176, %177 : vector<16x128xf32>
    %179 = vector.broadcast %2 : f32 to vector<16x128xf32>
    %180 = arith.mulf %93, %179 : vector<16x128xf32>
    %181 = vector.broadcast %8 : f32 to vector<16x128xf32>
    %182 = arith.mulf %96, %181 : vector<16x128xf32>
    %183 = arith.addf %180, %182 : vector<16x128xf32>
    %184 = vector.broadcast %14 : f32 to vector<16x128xf32>
    %185 = arith.mulf %99, %184 : vector<16x128xf32>
    %186 = arith.addf %183, %185 : vector<16x128xf32>
    %187 = vector.broadcast %20 : f32 to vector<16x128xf32>
    %188 = arith.mulf %102, %187 : vector<16x128xf32>
    %189 = arith.addf %186, %188 : vector<16x128xf32>
    %190 = vector.broadcast %26 : f32 to vector<16x128xf32>
    %191 = arith.mulf %105, %190 : vector<16x128xf32>
    %192 = arith.addf %189, %191 : vector<16x128xf32>
    %193 = vector.broadcast %32 : f32 to vector<16x128xf32>
    %194 = arith.mulf %108, %193 : vector<16x128xf32>
    %195 = arith.addf %192, %194 : vector<16x128xf32>
    %196 = vector.broadcast %38 : f32 to vector<16x128xf32>
    %197 = arith.mulf %111, %196 : vector<16x128xf32>
    %198 = arith.addf %195, %197 : vector<16x128xf32>
    %199 = vector.broadcast %44 : f32 to vector<16x128xf32>
    %200 = arith.mulf %114, %199 : vector<16x128xf32>
    %201 = arith.addf %198, %200 : vector<16x128xf32>
    %202 = vector.broadcast %50 : f32 to vector<16x128xf32>
    %203 = arith.addf %201, %202 : vector<16x128xf32>
    %cst_188 = arith.constant 5.000000e-01 : f32
    %204 = vector.broadcast %cst_188 : f32 to vector<16x128xf32>
    %205 = arith.mulf %204, %203 : vector<16x128xf32>
    %206 = math.tanh %205 : vector<16x128xf32>
    %cst_189 = arith.constant 5.000000e-01 : f32
    %207 = vector.broadcast %cst_189 : f32 to vector<16x128xf32>
    %208 = arith.mulf %207, %206 : vector<16x128xf32>
    %cst_190 = arith.constant 5.000000e-01 : f32
    %209 = vector.broadcast %cst_190 : f32 to vector<16x128xf32>
    %210 = arith.addf %208, %209 : vector<16x128xf32>
    %211 = vector.broadcast %3 : f32 to vector<16x128xf32>
    %212 = arith.mulf %93, %211 : vector<16x128xf32>
    %213 = vector.broadcast %9 : f32 to vector<16x128xf32>
    %214 = arith.mulf %96, %213 : vector<16x128xf32>
    %215 = arith.addf %212, %214 : vector<16x128xf32>
    %216 = vector.broadcast %15 : f32 to vector<16x128xf32>
    %217 = arith.mulf %99, %216 : vector<16x128xf32>
    %218 = arith.addf %215, %217 : vector<16x128xf32>
    %219 = vector.broadcast %21 : f32 to vector<16x128xf32>
    %220 = arith.mulf %102, %219 : vector<16x128xf32>
    %221 = arith.addf %218, %220 : vector<16x128xf32>
    %222 = vector.broadcast %27 : f32 to vector<16x128xf32>
    %223 = arith.mulf %105, %222 : vector<16x128xf32>
    %224 = arith.addf %221, %223 : vector<16x128xf32>
    %225 = vector.broadcast %33 : f32 to vector<16x128xf32>
    %226 = arith.mulf %108, %225 : vector<16x128xf32>
    %227 = arith.addf %224, %226 : vector<16x128xf32>
    %228 = vector.broadcast %39 : f32 to vector<16x128xf32>
    %229 = arith.mulf %111, %228 : vector<16x128xf32>
    %230 = arith.addf %227, %229 : vector<16x128xf32>
    %231 = vector.broadcast %45 : f32 to vector<16x128xf32>
    %232 = arith.mulf %114, %231 : vector<16x128xf32>
    %233 = arith.addf %230, %232 : vector<16x128xf32>
    %234 = vector.broadcast %51 : f32 to vector<16x128xf32>
    %235 = arith.addf %233, %234 : vector<16x128xf32>
    %cst_191 = arith.constant 5.000000e-01 : f32
    %236 = vector.broadcast %cst_191 : f32 to vector<16x128xf32>
    %237 = arith.mulf %236, %235 : vector<16x128xf32>
    %238 = math.tanh %237 : vector<16x128xf32>
    %cst_192 = arith.constant 5.000000e-01 : f32
    %239 = vector.broadcast %cst_192 : f32 to vector<16x128xf32>
    %240 = arith.mulf %239, %238 : vector<16x128xf32>
    %cst_193 = arith.constant 5.000000e-01 : f32
    %241 = vector.broadcast %cst_193 : f32 to vector<16x128xf32>
    %242 = arith.addf %240, %241 : vector<16x128xf32>
    %243 = vector.broadcast %4 : f32 to vector<16x128xf32>
    %244 = arith.mulf %93, %243 : vector<16x128xf32>
    %245 = vector.broadcast %10 : f32 to vector<16x128xf32>
    %246 = arith.mulf %96, %245 : vector<16x128xf32>
    %247 = arith.addf %244, %246 : vector<16x128xf32>
    %248 = vector.broadcast %16 : f32 to vector<16x128xf32>
    %249 = arith.mulf %99, %248 : vector<16x128xf32>
    %250 = arith.addf %247, %249 : vector<16x128xf32>
    %251 = vector.broadcast %22 : f32 to vector<16x128xf32>
    %252 = arith.mulf %102, %251 : vector<16x128xf32>
    %253 = arith.addf %250, %252 : vector<16x128xf32>
    %254 = vector.broadcast %28 : f32 to vector<16x128xf32>
    %255 = arith.mulf %105, %254 : vector<16x128xf32>
    %256 = arith.addf %253, %255 : vector<16x128xf32>
    %257 = vector.broadcast %34 : f32 to vector<16x128xf32>
    %258 = arith.mulf %108, %257 : vector<16x128xf32>
    %259 = arith.addf %256, %258 : vector<16x128xf32>
    %260 = vector.broadcast %40 : f32 to vector<16x128xf32>
    %261 = arith.mulf %111, %260 : vector<16x128xf32>
    %262 = arith.addf %259, %261 : vector<16x128xf32>
    %263 = vector.broadcast %46 : f32 to vector<16x128xf32>
    %264 = arith.mulf %114, %263 : vector<16x128xf32>
    %265 = arith.addf %262, %264 : vector<16x128xf32>
    %266 = vector.broadcast %52 : f32 to vector<16x128xf32>
    %267 = arith.addf %265, %266 : vector<16x128xf32>
    %cst_194 = arith.constant 5.000000e-01 : f32
    %268 = vector.broadcast %cst_194 : f32 to vector<16x128xf32>
    %269 = arith.mulf %268, %267 : vector<16x128xf32>
    %270 = math.tanh %269 : vector<16x128xf32>
    %cst_195 = arith.constant 5.000000e-01 : f32
    %271 = vector.broadcast %cst_195 : f32 to vector<16x128xf32>
    %272 = arith.mulf %271, %270 : vector<16x128xf32>
    %cst_196 = arith.constant 5.000000e-01 : f32
    %273 = vector.broadcast %cst_196 : f32 to vector<16x128xf32>
    %274 = arith.addf %272, %273 : vector<16x128xf32>
    %275 = vector.broadcast %5 : f32 to vector<16x128xf32>
    %276 = arith.mulf %93, %275 : vector<16x128xf32>
    %277 = vector.broadcast %11 : f32 to vector<16x128xf32>
    %278 = arith.mulf %96, %277 : vector<16x128xf32>
    %279 = arith.addf %276, %278 : vector<16x128xf32>
    %280 = vector.broadcast %17 : f32 to vector<16x128xf32>
    %281 = arith.mulf %99, %280 : vector<16x128xf32>
    %282 = arith.addf %279, %281 : vector<16x128xf32>
    %283 = vector.broadcast %23 : f32 to vector<16x128xf32>
    %284 = arith.mulf %102, %283 : vector<16x128xf32>
    %285 = arith.addf %282, %284 : vector<16x128xf32>
    %286 = vector.broadcast %29 : f32 to vector<16x128xf32>
    %287 = arith.mulf %105, %286 : vector<16x128xf32>
    %288 = arith.addf %285, %287 : vector<16x128xf32>
    %289 = vector.broadcast %35 : f32 to vector<16x128xf32>
    %290 = arith.mulf %108, %289 : vector<16x128xf32>
    %291 = arith.addf %288, %290 : vector<16x128xf32>
    %292 = vector.broadcast %41 : f32 to vector<16x128xf32>
    %293 = arith.mulf %111, %292 : vector<16x128xf32>
    %294 = arith.addf %291, %293 : vector<16x128xf32>
    %295 = vector.broadcast %47 : f32 to vector<16x128xf32>
    %296 = arith.mulf %114, %295 : vector<16x128xf32>
    %297 = arith.addf %294, %296 : vector<16x128xf32>
    %298 = vector.broadcast %53 : f32 to vector<16x128xf32>
    %299 = arith.addf %297, %298 : vector<16x128xf32>
    %cst_197 = arith.constant 5.000000e-01 : f32
    %300 = vector.broadcast %cst_197 : f32 to vector<16x128xf32>
    %301 = arith.mulf %300, %299 : vector<16x128xf32>
    %302 = math.tanh %301 : vector<16x128xf32>
    %cst_198 = arith.constant 5.000000e-01 : f32
    %303 = vector.broadcast %cst_198 : f32 to vector<16x128xf32>
    %304 = arith.mulf %303, %302 : vector<16x128xf32>
    %cst_199 = arith.constant 5.000000e-01 : f32
    %305 = vector.broadcast %cst_199 : f32 to vector<16x128xf32>
    %306 = arith.addf %304, %305 : vector<16x128xf32>
    %307 = vector.broadcast %54 : f32 to vector<16x128xf32>
    %308 = arith.mulf %146, %307 : vector<16x128xf32>
    %309 = vector.broadcast %58 : f32 to vector<16x128xf32>
    %310 = arith.mulf %178, %309 : vector<16x128xf32>
    %311 = arith.addf %308, %310 : vector<16x128xf32>
    %312 = vector.broadcast %62 : f32 to vector<16x128xf32>
    %313 = arith.mulf %210, %312 : vector<16x128xf32>
    %314 = arith.addf %311, %313 : vector<16x128xf32>
    %315 = vector.broadcast %66 : f32 to vector<16x128xf32>
    %316 = arith.mulf %242, %315 : vector<16x128xf32>
    %317 = arith.addf %314, %316 : vector<16x128xf32>
    %318 = vector.broadcast %70 : f32 to vector<16x128xf32>
    %319 = arith.mulf %274, %318 : vector<16x128xf32>
    %320 = arith.addf %317, %319 : vector<16x128xf32>
    %321 = vector.broadcast %74 : f32 to vector<16x128xf32>
    %322 = arith.mulf %306, %321 : vector<16x128xf32>
    %323 = arith.addf %320, %322 : vector<16x128xf32>
    %324 = vector.broadcast %78 : f32 to vector<16x128xf32>
    %325 = arith.addf %323, %324 : vector<16x128xf32>
    %cst_200 = arith.constant 5.000000e-01 : f32
    %326 = vector.broadcast %cst_200 : f32 to vector<16x128xf32>
    %327 = arith.mulf %326, %325 : vector<16x128xf32>
    %328 = math.tanh %327 : vector<16x128xf32>
    %cst_201 = arith.constant 5.000000e-01 : f32
    %329 = vector.broadcast %cst_201 : f32 to vector<16x128xf32>
    %330 = arith.mulf %329, %328 : vector<16x128xf32>
    %cst_202 = arith.constant 5.000000e-01 : f32
    %331 = vector.broadcast %cst_202 : f32 to vector<16x128xf32>
    %332 = arith.addf %330, %331 : vector<16x128xf32>
    %333 = vector.broadcast %55 : f32 to vector<16x128xf32>
    %334 = arith.mulf %146, %333 : vector<16x128xf32>
    %335 = vector.broadcast %59 : f32 to vector<16x128xf32>
    %336 = arith.mulf %178, %335 : vector<16x128xf32>
    %337 = arith.addf %334, %336 : vector<16x128xf32>
    %338 = vector.broadcast %63 : f32 to vector<16x128xf32>
    %339 = arith.mulf %210, %338 : vector<16x128xf32>
    %340 = arith.addf %337, %339 : vector<16x128xf32>
    %341 = vector.broadcast %67 : f32 to vector<16x128xf32>
    %342 = arith.mulf %242, %341 : vector<16x128xf32>
    %343 = arith.addf %340, %342 : vector<16x128xf32>
    %344 = vector.broadcast %71 : f32 to vector<16x128xf32>
    %345 = arith.mulf %274, %344 : vector<16x128xf32>
    %346 = arith.addf %343, %345 : vector<16x128xf32>
    %347 = vector.broadcast %75 : f32 to vector<16x128xf32>
    %348 = arith.mulf %306, %347 : vector<16x128xf32>
    %349 = arith.addf %346, %348 : vector<16x128xf32>
    %350 = vector.broadcast %79 : f32 to vector<16x128xf32>
    %351 = arith.addf %349, %350 : vector<16x128xf32>
    %cst_203 = arith.constant 5.000000e-01 : f32
    %352 = vector.broadcast %cst_203 : f32 to vector<16x128xf32>
    %353 = arith.mulf %352, %351 : vector<16x128xf32>
    %354 = math.tanh %353 : vector<16x128xf32>
    %cst_204 = arith.constant 5.000000e-01 : f32
    %355 = vector.broadcast %cst_204 : f32 to vector<16x128xf32>
    %356 = arith.mulf %355, %354 : vector<16x128xf32>
    %cst_205 = arith.constant 5.000000e-01 : f32
    %357 = vector.broadcast %cst_205 : f32 to vector<16x128xf32>
    %358 = arith.addf %356, %357 : vector<16x128xf32>
    %359 = vector.broadcast %56 : f32 to vector<16x128xf32>
    %360 = arith.mulf %146, %359 : vector<16x128xf32>
    %361 = vector.broadcast %60 : f32 to vector<16x128xf32>
    %362 = arith.mulf %178, %361 : vector<16x128xf32>
    %363 = arith.addf %360, %362 : vector<16x128xf32>
    %364 = vector.broadcast %64 : f32 to vector<16x128xf32>
    %365 = arith.mulf %210, %364 : vector<16x128xf32>
    %366 = arith.addf %363, %365 : vector<16x128xf32>
    %367 = vector.broadcast %68 : f32 to vector<16x128xf32>
    %368 = arith.mulf %242, %367 : vector<16x128xf32>
    %369 = arith.addf %366, %368 : vector<16x128xf32>
    %370 = vector.broadcast %72 : f32 to vector<16x128xf32>
    %371 = arith.mulf %274, %370 : vector<16x128xf32>
    %372 = arith.addf %369, %371 : vector<16x128xf32>
    %373 = vector.broadcast %76 : f32 to vector<16x128xf32>
    %374 = arith.mulf %306, %373 : vector<16x128xf32>
    %375 = arith.addf %372, %374 : vector<16x128xf32>
    %376 = vector.broadcast %80 : f32 to vector<16x128xf32>
    %377 = arith.addf %375, %376 : vector<16x128xf32>
    %cst_206 = arith.constant 5.000000e-01 : f32
    %378 = vector.broadcast %cst_206 : f32 to vector<16x128xf32>
    %379 = arith.mulf %378, %377 : vector<16x128xf32>
    %380 = math.tanh %379 : vector<16x128xf32>
    %cst_207 = arith.constant 5.000000e-01 : f32
    %381 = vector.broadcast %cst_207 : f32 to vector<16x128xf32>
    %382 = arith.mulf %381, %380 : vector<16x128xf32>
    %cst_208 = arith.constant 5.000000e-01 : f32
    %383 = vector.broadcast %cst_208 : f32 to vector<16x128xf32>
    %384 = arith.addf %382, %383 : vector<16x128xf32>
    %385 = vector.broadcast %57 : f32 to vector<16x128xf32>
    %386 = arith.mulf %146, %385 : vector<16x128xf32>
    %387 = vector.broadcast %61 : f32 to vector<16x128xf32>
    %388 = arith.mulf %178, %387 : vector<16x128xf32>
    %389 = arith.addf %386, %388 : vector<16x128xf32>
    %390 = vector.broadcast %65 : f32 to vector<16x128xf32>
    %391 = arith.mulf %210, %390 : vector<16x128xf32>
    %392 = arith.addf %389, %391 : vector<16x128xf32>
    %393 = vector.broadcast %69 : f32 to vector<16x128xf32>
    %394 = arith.mulf %242, %393 : vector<16x128xf32>
    %395 = arith.addf %392, %394 : vector<16x128xf32>
    %396 = vector.broadcast %73 : f32 to vector<16x128xf32>
    %397 = arith.mulf %274, %396 : vector<16x128xf32>
    %398 = arith.addf %395, %397 : vector<16x128xf32>
    %399 = vector.broadcast %77 : f32 to vector<16x128xf32>
    %400 = arith.mulf %306, %399 : vector<16x128xf32>
    %401 = arith.addf %398, %400 : vector<16x128xf32>
    %402 = vector.broadcast %81 : f32 to vector<16x128xf32>
    %403 = arith.addf %401, %402 : vector<16x128xf32>
    %cst_209 = arith.constant 5.000000e-01 : f32
    %404 = vector.broadcast %cst_209 : f32 to vector<16x128xf32>
    %405 = arith.mulf %404, %403 : vector<16x128xf32>
    %406 = math.tanh %405 : vector<16x128xf32>
    %cst_210 = arith.constant 5.000000e-01 : f32
    %407 = vector.broadcast %cst_210 : f32 to vector<16x128xf32>
    %408 = arith.mulf %407, %406 : vector<16x128xf32>
    %cst_211 = arith.constant 5.000000e-01 : f32
    %409 = vector.broadcast %cst_211 : f32 to vector<16x128xf32>
    %410 = arith.addf %408, %409 : vector<16x128xf32>
    %411 = vector.broadcast %82 : f32 to vector<16x128xf32>
    %412 = arith.mulf %332, %411 : vector<16x128xf32>
    %413 = vector.broadcast %83 : f32 to vector<16x128xf32>
    %414 = arith.mulf %358, %413 : vector<16x128xf32>
    %415 = arith.addf %412, %414 : vector<16x128xf32>
    %416 = vector.broadcast %84 : f32 to vector<16x128xf32>
    %417 = arith.mulf %384, %416 : vector<16x128xf32>
    %418 = arith.addf %415, %417 : vector<16x128xf32>
    %419 = vector.broadcast %85 : f32 to vector<16x128xf32>
    %420 = arith.mulf %410, %419 : vector<16x128xf32>
    %421 = arith.addf %418, %420 : vector<16x128xf32>
    %422 = vector.broadcast %86 : f32 to vector<16x128xf32>
    %423 = arith.addf %421, %422 : vector<16x128xf32>
    %cst_212 = arith.constant 5.000000e-01 : f32
    %424 = vector.broadcast %cst_212 : f32 to vector<16x128xf32>
    %425 = arith.mulf %424, %423 : vector<16x128xf32>
    %426 = math.tanh %425 : vector<16x128xf32>
    %cst_213 = arith.constant 5.000000e-01 : f32
    %427 = vector.broadcast %cst_213 : f32 to vector<16x128xf32>
    %428 = arith.mulf %427, %426 : vector<16x128xf32>
    %cst_214 = arith.constant 5.000000e-01 : f32
    %429 = vector.broadcast %cst_214 : f32 to vector<16x128xf32>
    %430 = arith.addf %428, %429 : vector<16x128xf32>
    %431 = arith.index_cast %90 : i32 to index
    %c0_215 = arith.constant 0 : index
    %432 = vector.load %arg8[%431, %c0_215] : memref<16x128xf32, #tpu.memory_space<vmem>>, vector<16x128xf32>
    tpu.vector_store %arg8[%431, %c0_215], %430 {strides = array<i32>} : memref<16x128xf32, #tpu.memory_space<vmem>>, vector<16x128xf32>,
    %c1_i32_216 = arith.constant 1 : i32
    return
  }
  func.func @transform_0(%arg0: i32) -> (i32, i32) {
    %c0_i32 = arith.constant 0 : i32
    %c0_i32_0 = arith.constant 0 : i32
    %c0_i32_1 = arith.constant 0 : i32
    return %c0_i32, %c0_i32_0 : i32, i32
  }
  func.func @transform_1(%arg0: i32) -> (i32, i32) {
    %c0_i32 = arith.constant 0 : i32
    %c0_i32_0 = arith.constant 0 : i32
    %c0_i32_1 = arith.constant 0 : i32
    return %c0_i32, %c0_i32_0 : i32, i32
  }
  func.func @transform_2(%arg0: i32) -> (i32, i32) {
    %c0_i32 = arith.constant 0 : i32
    %c0_i32_0 = arith.constant 0 : i32
    %c0_i32_1 = arith.constant 0 : i32
    return %c0_i32, %c0_i32_0 : i32, i32
  }
  func.func @transform_3(%arg0: i32) -> (i32, i32) {
    %c0_i32 = arith.constant 0 : i32
    %c0_i32_0 = arith.constant 0 : i32
    %c0_i32_1 = arith.constant 0 : i32
    return %c0_i32, %c0_i32_0 : i32, i32
  }
  func.func @transform_4(%arg0: i32) -> (i32, i32) {
    %c0_i32 = arith.constant 0 : i32
    %c0_i32_0 = arith.constant 0 : i32
    %c0_i32_1 = arith.constant 0 : i32
    return %c0_i32, %c0_i32_0 : i32, i32
  }
  func.func @transform_5(%arg0: i32) -> (i32, i32) {
    %c0_i32 = arith.constant 0 : i32
    %c0_i32_0 = arith.constant 0 : i32
    %c0_i32_1 = arith.constant 0 : i32
    return %c0_i32, %c0_i32_0 : i32, i32
  }
  func.func @transform_6(%arg0: i32) -> (i32, i32, i32) {
    %c0_i32 = arith.constant 0 : i32
    %c0_i32_0 = arith.constant 0 : i32
    %c0_i32_1 = arith.constant 0 : i32
    return %c0_i32, %arg0, %c0_i32_0 : i32, i32, i32
  }
  func.func @transform_7(%arg0: i32) -> (i32, i32) {
    %c0_i32 = arith.constant 0 : i32
    %c0_i32_0 = arith.constant 0 : i32
    return %arg0, %c0_i32 : i32, i32
  }
}

</mosaic_0001>

<llo_original>
// kernel: tpu_custom_call.1
$region0: #{tpu_custom_call.1}
  #allocation0 [shape = 'u32[]', space=smem, size = 0x4, offset = 0x4, fixed_abs, tag = 'smem constant byte address 0x4 - core index']
  #allocation1 [shape = 'u32[72,128]{1,0:T(1,128)}', space=vmem, size = 0x9000, scoped, tag = 'internal scratch']
  #allocation2 [shape = 'f32[1,1]{1,0:T(1,128)S(6)}', space=smem, size = 0x200, scoped, tag = 'scoped memory for tpu_custom_call.1']
  %s0 = inlined_call_operand.vmem [shape: f32[8,6], index: 0, kind: input, shape index: {}]
  %s1 = inlined_call_operand.vmem [shape: f32[1,6], index: 1, kind: input, shape index: {}]
  %s2 = inlined_call_operand.vmem [shape: f32[6,4], index: 2, kind: input, shape index: {}]
  %s3 = inlined_call_operand.vmem [shape: f32[1,4], index: 3, kind: input, shape index: {}]
  %s4 = inlined_call_operand.vmem [shape: f32[4,1], index: 4, kind: input, shape index: {}]
  %s5 = inlined_call_operand.<no memory space> [shape: f32[1,1], index: 5, kind: input, shape index: {}]
  %s6 = inlined_call_operand.hbm [shape: f32[8,16,128], index: 6, kind: input, shape index: {}]
  %s7 = inlined_call_operand.hbm [shape: f32[16,128], index: 7, kind: output, shape index: {}]
  %s8 = sld [smem:[#allocation0]]
  $region62: #{tpu_custom_call.1} parent=0
    _
  %s10 = ssub.s32 1, %s8
  %s11 = scalar_select 0, %s10, %s8
  %12 = sst [smem:[#allocation2]] %s5
  $region1: #{tpu_custom_call.1} parent=0
    #allocation3 [shape = 'u8[4096]{0}', space=smem, size = 0x1000, scoped, tag = 'input window, operand 0, single buffered']
    #allocation4 [shape = 's32[1]{0}', space=sflag, size = 0x4, scoped, tag = 'scoped memory for tpu_custom_call.1']
    #allocation5 [shape = 's32[1]{0}', space=sflag, size = 0x4, scoped, tag = 'scoped memory for tpu_custom_call.1']
    #allocation6 [shape = 's32[1]{0}', space=sflag, size = 0x4, scoped, tag = 'scoped memory for tpu_custom_call.1']
    #allocation7 [shape = 'u8[512]{0}', space=smem, size = 0x200, scoped, tag = 'input window, operand 1, single buffered']
    #allocation8 [shape = 's32[1]{0}', space=sflag, size = 0x4, scoped, tag = 'scoped memory for tpu_custom_call.1']
    #allocation9 [shape = 'u8[4096]{0}', space=smem, size = 0x1000, scoped, tag = 'input window, operand 2, single buffered']
    #allocation10 [shape = 'u8[512]{0}', space=smem, size = 0x200, scoped, tag = 'input window, operand 3, single buffered']
    #allocation11 [shape = 's32[1]{0}', space=sflag, size = 0x4, scoped, tag = 'scoped memory for tpu_custom_call.1']
    #allocation12 [shape = 'u8[2048]{0}', space=smem, size = 0x800, scoped, tag = 'input window, operand 4, single buffered']
    #allocation13 [shape = 'u8[65536]{0}', space=vmem, size = 0x10000, scoped, tag = 'input window, operand 6, single buffered']
    #allocation14 [shape = 'u8[8192]{0}', space=vmem, size = 0x2000, scoped, tag = 'output window, operand 0, single buffered']
    %13 = vsyncpa [#allocation6], 0
    %14 = vsyncpa [#allocation8], 0
    %15 = vsyncpa [#allocation11], 0
    %16 = vsyncpa [#allocation4], 0
    %17 = vsyncpa [#allocation5], 0
    // Predicated region
    $region2: #{tpu_custom_call.1} parent=1 // pred_check
      _
    $region3: #{tpu_custom_call.1} parent=1 // pred_check_branch
      %19 = sbr.rel (0) target = $region5
    $region4: #{tpu_custom_call.1} parent=1 // pred_region
      %21 = vsyncadd [#allocation6], 0
      %s23 = sshll.u32 %s0, 4
      %s24 = int_to_ptr.vmem [resolvable:$true] %s23
      %26 = dma.vmem_to_smem %s24, 128, [#allocation3], [#allocation6]
    $region5: #{tpu_custom_call.1} parent=1 // pred_fallthru
      _
    // Predicated region
    $region6: #{tpu_custom_call.1} parent=1 // pred_check
      _
    $region7: #{tpu_custom_call.1} parent=1 // pred_check_branch
      %28 = sbr.rel (0) target = $region9
    $region8: #{tpu_custom_call.1} parent=1 // pred_region
      %30 = vsyncadd [#allocation8], 0
      %s32 = sshll.u32 %s1, 4
      %s33 = int_to_ptr.vmem [resolvable:$true] %s32
      %35 = dma.vmem_to_smem %s33, 16, [#allocation7], [#allocation8]
    $region9: #{tpu_custom_call.1} parent=1 // pred_fallthru
      _
    // Predicated region
    $region10: #{tpu_custom_call.1} parent=1 // pred_check
      _
    $region11: #{tpu_custom_call.1} parent=1 // pred_check_branch
      %37 = sbr.rel (0) target = $region13
    $region12: #{tpu_custom_call.1} parent=1 // pred_region
      %39 = vsyncadd [#allocation8], 0
      %s41 = sshll.u32 %s2, 4
      %s42 = int_to_ptr.vmem [resolvable:$true] %s41
      %44 = dma.vmem_to_smem %s42, 128, [#allocation9], [#allocation8]
    $region13: #{tpu_custom_call.1} parent=1 // pred_fallthru
      _
    // Predicated region
    $region14: #{tpu_custom_call.1} parent=1 // pred_check
      _
    $region15: #{tpu_custom_call.1} parent=1 // pred_check_branch
      %46 = sbr.rel (0) target = $region17
    $region16: #{tpu_custom_call.1} parent=1 // pred_region
      %48 = vsyncadd [#allocation11], 0
      %s50 = sshll.u32 %s3, 4
      %s51 = int_to_ptr.vmem [resolvable:$true] %s50
      %53 = dma.vmem_to_smem %s51, 16, [#allocation10], [#allocation11]
    $region17: #{tpu_custom_call.1} parent=1 // pred_fallthru
      _
    // Predicated region
    $region18: #{tpu_custom_call.1} parent=1 // pred_check
      _
    $region19: #{tpu_custom_call.1} parent=1 // pred_check_branch
      %55 = sbr.rel (0) target = $region21
    $region20: #{tpu_custom_call.1} parent=1 // pred_region
      %57 = vsyncadd [#allocation11], 0
      %s59 = sshll.u32 %s4, 4
      %s60 = int_to_ptr.vmem [resolvable:$true] %s59
      %62 = dma.vmem_to_smem %s60, 64, [#allocation12], [#allocation11]
    $region21: #{tpu_custom_call.1} parent=1 // pred_fallthru
      _
    // Predicated region
    $region22: #{tpu_custom_call.1} parent=1 // pred_check
      _
    $region23: #{tpu_custom_call.1} parent=1 // pred_check_branch
      %64 = sbr.rel (0) target = $region25
    $region24: #{tpu_custom_call.1} parent=1 // pred_region
      _
    $region25: #{tpu_custom_call.1} parent=1 // pred_fallthru
      _
    // Predicated region
    $region26: #{tpu_custom_call.1} parent=1 // pred_check
      _
    $region27: #{tpu_custom_call.1} parent=1 // pred_check_branch
      %66 = sbr.rel (0) target = $region29
    $region28: #{tpu_custom_call.1} parent=1 // pred_region
      %68 = vsyncadd [#allocation4], 0
      %s69 = sshll.u32 %s6, 4
      %s70 = int_to_ptr.hbm [resolvable:$true] %s69
      %s71 = sshll.u32 [#allocation13], 4
      %s72 = int_to_ptr.vmem [resolvable:$true] %s71
      %77 = dma.hbm_to_vmem [thread:$0]  %s70, 2048, %s72, [#allocation4], 128, 128, 8
    $region29: #{tpu_custom_call.1} parent=1 // pred_fallthru
      _
    // Predicated region
    $region30: #{tpu_custom_call.1} parent=1 // pred_check
      _
    $region31: #{tpu_custom_call.1} parent=1 // pred_check_branch
      %79 = sbr.rel (0) target = $region33
    $region32: #{tpu_custom_call.1} parent=1 // pred_region
      %81 = dma.done [#allocation6], 128
    $region33: #{tpu_custom_call.1} parent=1 // pred_fallthru
      _
    // Predicated region
    $region34: #{tpu_custom_call.1} parent=1 // pred_check
      _
    $region35: #{tpu_custom_call.1} parent=1 // pred_check_branch
      %83 = sbr.rel (0) target = $region37
    $region36: #{tpu_custom_call.1} parent=1 // pred_region
      %85 = dma.done [#allocation8], 16
    $region37: #{tpu_custom_call.1} parent=1 // pred_fallthru
      _
    // Predicated region
    $region38: #{tpu_custom_call.1} parent=1 // pred_check
      _
    $region39: #{tpu_custom_call.1} parent=1 // pred_check_branch
      %87 = sbr.rel (0) target = $region41
    $region40: #{tpu_custom_call.1} parent=1 // pred_region
      %89 = dma.done [#allocation8], 128
    $region41: #{tpu_custom_call.1} parent=1 // pred_fallthru
      _
    // Predicated region
    $region42: #{tpu_custom_call.1} parent=1 // pred_check
      _
    $region43: #{tpu_custom_call.1} parent=1 // pred_check_branch
      %91 = sbr.rel (0) target = $region45
    $region44: #{tpu_custom_call.1} parent=1 // pred_region
      %93 = dma.done [#allocation11], 16
    $region45: #{tpu_custom_call.1} parent=1 // pred_fallthru
      _
    // Predicated region
    $region46: #{tpu_custom_call.1} parent=1 // pred_check
      _
    $region47: #{tpu_custom_call.1} parent=1 // pred_check_branch
      %95 = sbr.rel (0) target = $region49
    $region48: #{tpu_custom_call.1} parent=1 // pred_region
      %97 = dma.done [#allocation11], 64
    $region49: #{tpu_custom_call.1} parent=1 // pred_fallthru
      _
    // Predicated region
    $region50: #{tpu_custom_call.1} parent=1 // pred_check
      _
    $region51: #{tpu_custom_call.1} parent=1 // pred_check_branch
      %99 = sbr.rel (0) target = $region53
    $region52: #{tpu_custom_call.1} parent=1 // pred_region
      %101 = dma.done [#allocation4], 2048
    $region53: #{tpu_custom_call.1} parent=1 // pred_fallthru
      _
    %102 = sfence
    %s103 = sld [smem:[#allocation3]]
    %s104 = sld [smem:[#allocation3 + $0x1]]
    %s105 = sld [smem:[#allocation3 + $0x2]]
    %s106 = sld [smem:[#allocation3 + $0x3]]
    %s107 = sld [smem:[#allocation3 + $0x4]]
    %s108 = sld [smem:[#allocation3 + $0x5]]
    %s109 = sld [smem:[#allocation3 + $0x80]]
    %s110 = sld [smem:[#allocation3 + $0x81]]
    %s111 = sld [smem:[#allocation3 + $0x82]]
    %s112 = sld [smem:[#allocation3 + $0x83]]
    %s113 = sld [smem:[#allocation3 + $0x84]]
    %s114 = sld [smem:[#allocation3 + $0x85]]
    %s115 = sld [smem:[#allocation3 + $0x100]]
    %s116 = sld [smem:[#allocation3 + $0x101]]
    %s117 = sld [smem:[#allocation3 + $0x102]]
    %s118 = sld [smem:[#allocation3 + $0x103]]
    %s119 = sld [smem:[#allocation3 + $0x104]]
    %s120 = sld [smem:[#allocation3 + $0x105]]
    %s121 = sld [smem:[#allocation3 + $0x180]]
    %s122 = sld [smem:[#allocation3 + $0x181]]
    %s123 = sld [smem:[#allocation3 + $0x182]]
    %s124 = sld [smem:[#allocation3 + $0x183]]
    %s125 = sld [smem:[#allocation3 + $0x184]]
    %s126 = sld [smem:[#allocation3 + $0x185]]
    %s127 = sld [smem:[#allocation3 + $0x200]]
    %s128 = sld [smem:[#allocation3 + $0x201]]
    %s129 = sld [smem:[#allocation3 + $0x202]]
    %s130 = sld [smem:[#allocation3 + $0x203]]
    %s131 = sld [smem:[#allocation3 + $0x204]]
    %s132 = sld [smem:[#allocation3 + $0x205]]
    %s133 = sld [smem:[#allocation3 + $0x280]]
    %s134 = sld [smem:[#allocation3 + $0x281]]
    %s135 = sld [smem:[#allocation3 + $0x282]]
    %s136 = sld [smem:[#allocation3 + $0x283]]
    %s137 = sld [smem:[#allocation3 + $0x284]]
    %s138 = sld [smem:[#allocation3 + $0x285]]
    %s139 = sld [smem:[#allocation3 + $0x300]]
    %s140 = sld [smem:[#allocation3 + $0x301]]
    %s141 = sld [smem:[#allocation3 + $0x302]]
    %s142 = sld [smem:[#allocation3 + $0x303]]
    %s143 = sld [smem:[#allocation3 + $0x304]]
    %s144 = sld [smem:[#allocation3 + $0x305]]
    %s145 = sld [smem:[#allocation3 + $0x380]]
    %s146 = sld [smem:[#allocation3 + $0x381]]
    %s147 = sld [smem:[#allocation3 + $0x382]]
    %s148 = sld [smem:[#allocation3 + $0x383]]
    %s149 = sld [smem:[#allocation3 + $0x384]]
    %s150 = sld [smem:[#allocation3 + $0x385]]
    %s151 = sld [smem:[#allocation7]]
    %s152 = sld [smem:[#allocation7 + $0x1]]
    %s153 = sld [smem:[#allocation7 + $0x2]]
    %s154 = sld [smem:[#allocation7 + $0x3]]
    %s155 = sld [smem:[#allocation7 + $0x4]]
    %s156 = sld [smem:[#allocation7 + $0x5]]
    %s157 = sld [smem:[#allocation9]]
    %s158 = sld [smem:[#allocation9 + $0x1]]
    %s159 = sld [smem:[#allocation9 + $0x2]]
    %s160 = sld [smem:[#allocation9 + $0x3]]
    %s161 = sld [smem:[#allocation9 + $0x80]]
    %s162 = sld [smem:[#allocation9 + $0x81]]
    %s163 = sld [smem:[#allocation9 + $0x82]]
    %s164 = sld [smem:[#allocation9 + $0x83]]
    %s165 = sld [smem:[#allocation9 + $0x100]]
    %s166 = sld [smem:[#allocation9 + $0x101]]
    %s167 = sld [smem:[#allocation9 + $0x102]]
    %s168 = sld [smem:[#allocation9 + $0x103]]
    %s169 = sld [smem:[#allocation9 + $0x180]]
    %s170 = sld [smem:[#allocation9 + $0x181]]
    %s171 = sld [smem:[#allocation9 + $0x182]]
    %s172 = sld [smem:[#allocation9 + $0x183]]
    %s173 = sld [smem:[#allocation9 + $0x200]]
    %s174 = sld [smem:[#allocation9 + $0x201]]
    %s175 = sld [smem:[#allocation9 + $0x202]]
    %s176 = sld [smem:[#allocation9 + $0x203]]
    %s177 = sld [smem:[#allocation9 + $0x280]]
    %s178 = sld [smem:[#allocation9 + $0x281]]
    %s179 = sld [smem:[#allocation9 + $0x282]]
    %s180 = sld [smem:[#allocation9 + $0x283]]
    %s181 = sld [smem:[#allocation10]]
    %s182 = sld [smem:[#allocation10 + $0x1]]
    %s183 = sld [smem:[#allocation10 + $0x2]]
    %s184 = sld [smem:[#allocation10 + $0x3]]
    %s185 = sld [smem:[#allocation12]]
    %s186 = sld [smem:[#allocation12 + $0x80]]
    %s187 = sld [smem:[#allocation12 + $0x100]]
    %s188 = sld [smem:[#allocation12 + $0x180]]
    %s189 = sld [smem:[#allocation2]]
    %v190 = vld [vmem:[#allocation13] sm:$0xff]
    %v191 = vld [vmem:[#allocation13 + $0x8] sm:$0xff]
    %s192 = sadd.s32 0, 16
    %s193 = scalar_lea.vmem [#allocation13], %s192
    %v194 = vld [vmem:[%s193] sm:$0xff]
    %v195 = vld [vmem:[%s193 + $0x8] sm:$0xff]
    %s196 = sadd.s32 0, 32
    %s197 = scalar_lea.vmem [#allocation13], %s196
    %v198 = vld [vmem:[%s197] sm:$0xff]
    %v199 = vld [vmem:[%s197 + $0x8] sm:$0xff]
    %s200 = sadd.s32 0, 48
    %s201 = scalar_lea.vmem [#allocation13], %s200
    %v202 = vld [vmem:[%s201] sm:$0xff]
    %v203 = vld [vmem:[%s201 + $0x8] sm:$0xff]
    %s204 = sadd.s32 0, 64
    %s205 = scalar_lea.vmem [#allocation13], %s204
    %v206 = vld [vmem:[%s205] sm:$0xff]
    %v207 = vld [vmem:[%s205 + $0x8] sm:$0xff]
    %s208 = sadd.s32 0, 80
    %s209 = scalar_lea.vmem [#allocation13], %s208
    %v210 = vld [vmem:[%s209] sm:$0xff]
    %v211 = vld [vmem:[%s209 + $0x8] sm:$0xff]
    %s212 = sadd.s32 0, 96
    %s213 = scalar_lea.vmem [#allocation13], %s212
    %v214 = vld [vmem:[%s213] sm:$0xff]
    %v215 = vld [vmem:[%s213 + $0x8] sm:$0xff]
    %s216 = sadd.s32 0, 112
    %s217 = scalar_lea.vmem [#allocation13], %s216
    %v218 = vld [vmem:[%s217] sm:$0xff]
    %v219 = vld [vmem:[%s217 + $0x8] sm:$0xff]
    %v220 = vstv %s103
    %v221 = vmul.f32 %v190, %v220
    %v222 = vmul.f32 %v191, %v220
    %v223 = vstv %s109
    %v224 = vmul.f32 %v194, %v223
    %v225 = vmul.f32 %v195, %v223
    %v226 = vadd.f32 %v221, %v224
    %v227 = vadd.f32 %v222, %v225
    %v228 = vstv %s115
    %v229 = vmul.f32 %v198, %v228
    %v230 = vmul.f32 %v199, %v228
    %v231 = vadd.f32 %v226, %v229
    %v232 = vadd.f32 %v227, %v230
    %v233 = vstv %s121
    %v234 = vmul.f32 %v202, %v233
    %v235 = vmul.f32 %v203, %v233
    %v236 = vadd.f32 %v231, %v234
    %v237 = vadd.f32 %v232, %v235
    %v238 = vstv %s127
    %v239 = vmul.f32 %v206, %v238
    %v240 = vmul.f32 %v207, %v238
    %v241 = vadd.f32 %v236, %v239
    %v242 = vadd.f32 %v237, %v240
    %v243 = vstv %s133
    %v244 = vmul.f32 %v210, %v243
    %v245 = vmul.f32 %v211, %v243
    %v246 = vadd.f32 %v241, %v244
    %v247 = vadd.f32 %v242, %v245
    %v248 = vstv %s139
    %v249 = vmul.f32 %v214, %v248
    %v250 = vmul.f32 %v215, %v248
    %v251 = vadd.f32 %v246, %v249
    %v252 = vadd.f32 %v247, %v250
    %v253 = vstv %s145
    %v254 = vmul.f32 %v218, %v253
    %v255 = vmul.f32 %v219, %v253
    %v256 = vadd.f32 %v251, %v254
    %v257 = vadd.f32 %v252, %v255
    %v258 = vstv %s151
    %v259 = vadd.f32 %v256, %v258
    %v260 = vadd.f32 %v257, %v258
    %v261 = vmul.f32 %v259, 0.5
    %v262 = vmul.f32 %v260, 0.5
    %v263 = vtanh.pop %v261
    %v264 = vtanh.pop %v262
    %v265 = vmul.f32 %v263, 0.5
    %v266 = vmul.f32 %v264, 0.5
    %v267 = vadd.f32 %v265, 0.5
    %v268 = vadd.f32 %v266, 0.5
    %v269 = vstv %s104
    %v270 = vmul.f32 %v190, %v269
    %v271 = vmul.f32 %v191, %v269
    %v272 = vstv %s110
    %v273 = vmul.f32 %v194, %v272
    %v274 = vmul.f32 %v195, %v272
    %v275 = vadd.f32 %v270, %v273
    %v276 = vadd.f32 %v271, %v274
    %v277 = vstv %s116
    %v278 = vmul.f32 %v198, %v277
    %v279 = vmul.f32 %v199, %v277
    %v280 = vadd.f32 %v275, %v278
    %v281 = vadd.f32 %v276, %v279
    %v282 = vstv %s122
    %v283 = vmul.f32 %v202, %v282
    %v284 = vmul.f32 %v203, %v282
    %v285 = vadd.f32 %v280, %v283
    %v286 = vadd.f32 %v281, %v284
    %v287 = vstv %s128
    %v288 = vmul.f32 %v206, %v287
    %v289 = vmul.f32 %v207, %v287
    %v290 = vadd.f32 %v285, %v288
    %v291 = vadd.f32 %v286, %v289
    %v292 = vstv %s134
    %v293 = vmul.f32 %v210, %v292
    %v294 = vmul.f32 %v211, %v292
    %v295 = vadd.f32 %v290, %v293
    %v296 = vadd.f32 %v291, %v294
    %v297 = vstv %s140
    %v298 = vmul.f32 %v214, %v297
    %v299 = vmul.f32 %v215, %v297
    %v300 = vadd.f32 %v295, %v298
    %v301 = vadd.f32 %v296, %v299
    %v302 = vstv %s146
    %v303 = vmul.f32 %v218, %v302
    %v304 = vmul.f32 %v219, %v302
    %v305 = vadd.f32 %v300, %v303
    %v306 = vadd.f32 %v301, %v304
    %v307 = vstv %s152
    %v308 = vadd.f32 %v305, %v307
    %v309 = vadd.f32 %v306, %v307
    %v310 = vmul.f32 %v308, 0.5
    %v311 = vmul.f32 %v309, 0.5
    %v312 = vtanh.pop %v310
    %v313 = vtanh.pop %v311
    %v314 = vmul.f32 %v312, 0.5
    %v315 = vmul.f32 %v313, 0.5
    %v316 = vadd.f32 %v314, 0.5
    %v317 = vadd.f32 %v315, 0.5
    %v318 = vstv %s105
    %v319 = vmul.f32 %v190, %v318
    %v320 = vmul.f32 %v191, %v318
    %v321 = vstv %s111
    %v322 = vmul.f32 %v194, %v321
    %v323 = vmul.f32 %v195, %v321
    %v324 = vadd.f32 %v319, %v322
    %v325 = vadd.f32 %v320, %v323
    %v326 = vstv %s117
    %v327 = vmul.f32 %v198, %v326
    %v328 = vmul.f32 %v199, %v326
    %v329 = vadd.f32 %v324, %v327
    %v330 = vadd.f32 %v325, %v328
    %v331 = vstv %s123
    %v332 = vmul.f32 %v202, %v331
    %v333 = vmul.f32 %v203, %v331
    %v334 = vadd.f32 %v329, %v332
    %v335 = vadd.f32 %v330, %v333
    %v336 = vstv %s129
    %v337 = vmul.f32 %v206, %v336
    %v338 = vmul.f32 %v207, %v336
    %v339 = vadd.f32 %v334, %v337
    %v340 = vadd.f32 %v335, %v338
    %v341 = vstv %s135
    %v342 = vmul.f32 %v210, %v341
    %v343 = vmul.f32 %v211, %v341
    %v344 = vadd.f32 %v339, %v342
    %v345 = vadd.f32 %v340, %v343
    %v346 = vstv %s141
    %v347 = vmul.f32 %v214, %v346
    %v348 = vmul.f32 %v215, %v346
    %v349 = vadd.f32 %v344, %v347
    %v350 = vadd.f32 %v345, %v348
    %v351 = vstv %s147
    %v352 = vmul.f32 %v218, %v351
    %v353 = vmul.f32 %v219, %v351
    %v354 = vadd.f32 %v349, %v352
    %v355 = vadd.f32 %v350, %v353
    %v356 = vstv %s153
    %v357 = vadd.f32 %v354, %v356
    %v358 = vadd.f32 %v355, %v356
    %v359 = vmul.f32 %v357, 0.5
    %v360 = vmul.f32 %v358, 0.5
    %v361 = vtanh.pop %v359
    %v362 = vtanh.pop %v360
    %v363 = vmul.f32 %v361, 0.5
    %v364 = vmul.f32 %v362, 0.5
    %v365 = vadd.f32 %v363, 0.5
    %v366 = vadd.f32 %v364, 0.5
    %v367 = vstv %s106
    %v368 = vmul.f32 %v190, %v367
    %v369 = vmul.f32 %v191, %v367
    %v370 = vstv %s112
    %v371 = vmul.f32 %v194, %v370
    %v372 = vmul.f32 %v195, %v370
    %v373 = vadd.f32 %v368, %v371
    %v374 = vadd.f32 %v369, %v372
    %v375 = vstv %s118
    %v376 = vmul.f32 %v198, %v375
    %v377 = vmul.f32 %v199, %v375
    %v378 = vadd.f32 %v373, %v376
    %v379 = vadd.f32 %v374, %v377
    %v380 = vstv %s124
    %v381 = vmul.f32 %v202, %v380
    %v382 = vmul.f32 %v203, %v380
    %v383 = vadd.f32 %v378, %v381
    %v384 = vadd.f32 %v379, %v382
    %v385 = vstv %s130
    %v386 = vmul.f32 %v206, %v385
    %v387 = vmul.f32 %v207, %v385
    %v388 = vadd.f32 %v383, %v386
    %v389 = vadd.f32 %v384, %v387
    %v390 = vstv %s136
    %v391 = vmul.f32 %v210, %v390
    %v392 = vmul.f32 %v211, %v390
    %v393 = vadd.f32 %v388, %v391
    %v394 = vadd.f32 %v389, %v392
    %v395 = vstv %s142
    %v396 = vmul.f32 %v214, %v395
    %v397 = vmul.f32 %v215, %v395
    %v398 = vadd.f32 %v393, %v396
    %v399 = vadd.f32 %v394, %v397
    %v400 = vstv %s148
    %v401 = vmul.f32 %v218, %v400
    %v402 = vmul.f32 %v219, %v400
    %v403 = vadd.f32 %v398, %v401
    %v404 = vadd.f32 %v399, %v402
    %v405 = vstv %s154
    %v406 = vadd.f32 %v403, %v405
    %v407 = vadd.f32 %v404, %v405
    %v408 = vmul.f32 %v406, 0.5
    %v409 = vmul.f32 %v407, 0.5
    %v410 = vtanh.pop %v408
    %v411 = vtanh.pop %v409
    %v412 = vmul.f32 %v410, 0.5
    %v413 = vmul.f32 %v411, 0.5
    %v414 = vadd.f32 %v412, 0.5
    %v415 = vadd.f32 %v413, 0.5
    %v416 = vstv %s107
    %v417 = vmul.f32 %v190, %v416
    %v418 = vmul.f32 %v191, %v416
    %v419 = vstv %s113
    %v420 = vmul.f32 %v194, %v419
    %v421 = vmul.f32 %v195, %v419
    %v422 = vadd.f32 %v417, %v420
    %v423 = vadd.f32 %v418, %v421
    %v424 = vstv %s119
    %v425 = vmul.f32 %v198, %v424
    %v426 = vmul.f32 %v199, %v424
    %v427 = vadd.f32 %v422, %v425
    %v428 = vadd.f32 %v423, %v426
    %v429 = vstv %s125
    %v430 = vmul.f32 %v202, %v429
    %v431 = vmul.f32 %v203, %v429
    %v432 = vadd.f32 %v427, %v430
    %v433 = vadd.f32 %v428, %v431
    %v434 = vstv %s131
    %v435 = vmul.f32 %v206, %v434
    %v436 = vmul.f32 %v207, %v434
    %v437 = vadd.f32 %v432, %v435
    %v438 = vadd.f32 %v433, %v436
    %v439 = vstv %s137
    %v440 = vmul.f32 %v210, %v439
    %v441 = vmul.f32 %v211, %v439
    %v442 = vadd.f32 %v437, %v440
    %v443 = vadd.f32 %v438, %v441
    %v444 = vstv %s143
    %v445 = vmul.f32 %v214, %v444
    %v446 = vmul.f32 %v215, %v444
    %v447 = vadd.f32 %v442, %v445
    %v448 = vadd.f32 %v443, %v446
    %v449 = vstv %s149
    %v450 = vmul.f32 %v218, %v449
    %v451 = vmul.f32 %v219, %v449
    %v452 = vadd.f32 %v447, %v450
    %v453 = vadd.f32 %v448, %v451
    %v454 = vstv %s155
    %v455 = vadd.f32 %v452, %v454
    %v456 = vadd.f32 %v453, %v454
    %v457 = vmul.f32 %v455, 0.5
    %v458 = vmul.f32 %v456, 0.5
    %v459 = vtanh.pop %v457
    %v460 = vtanh.pop %v458
    %v461 = vmul.f32 %v459, 0.5
    %v462 = vmul.f32 %v460, 0.5
    %v463 = vadd.f32 %v461, 0.5
    %v464 = vadd.f32 %v462, 0.5
    %v465 = vstv %s108
    %v466 = vmul.f32 %v190, %v465
    %v467 = vmul.f32 %v191, %v465
    %v468 = vstv %s114
    %v469 = vmul.f32 %v194, %v468
    %v470 = vmul.f32 %v195, %v468
    %v471 = vadd.f32 %v466, %v469
    %v472 = vadd.f32 %v467, %v470
    %v473 = vstv %s120
    %v474 = vmul.f32 %v198, %v473
    %v475 = vmul.f32 %v199, %v473
    %v476 = vadd.f32 %v471, %v474
    %v477 = vadd.f32 %v472, %v475
    %v478 = vstv %s126
    %v479 = vmul.f32 %v202, %v478
    %v480 = vmul.f32 %v203, %v478
    %v481 = vadd.f32 %v476, %v479
    %v482 = vadd.f32 %v477, %v480
    %v483 = vstv %s132
    %v484 = vmul.f32 %v206, %v483
    %v485 = vmul.f32 %v207, %v483
    %v486 = vadd.f32 %v481, %v484
    %v487 = vadd.f32 %v482, %v485
    %v488 = vstv %s138
    %v489 = vmul.f32 %v210, %v488
    %v490 = vmul.f32 %v211, %v488
    %v491 = vadd.f32 %v486, %v489
    %v492 = vadd.f32 %v487, %v490
    %v493 = vstv %s144
    %v494 = vmul.f32 %v214, %v493
    %v495 = vmul.f32 %v215, %v493
    %v496 = vadd.f32 %v491, %v494
    %v497 = vadd.f32 %v492, %v495
    %v498 = vstv %s150
    %v499 = vmul.f32 %v218, %v498
    %v500 = vmul.f32 %v219, %v498
    %v501 = vadd.f32 %v496, %v499
    %v502 = vadd.f32 %v497, %v500
    %v503 = vstv %s156
    %v504 = vadd.f32 %v501, %v503
    %v505 = vadd.f32 %v502, %v503
    %v506 = vmul.f32 %v504, 0.5
    %v507 = vmul.f32 %v505, 0.5
    %v508 = vtanh.pop %v506
    %v509 = vtanh.pop %v507
    %v510 = vmul.f32 %v508, 0.5
    %v511 = vmul.f32 %v509, 0.5
    %v512 = vadd.f32 %v510, 0.5
    %v513 = vadd.f32 %v511, 0.5
    %v514 = vstv %s157
    %v515 = vmul.f32 %v267, %v514
    %v516 = vmul.f32 %v268, %v514
    %v517 = vstv %s161
    %v518 = vmul.f32 %v316, %v517
    %v519 = vmul.f32 %v317, %v517
    %v520 = vadd.f32 %v515, %v518
    %v521 = vadd.f32 %v516, %v519
    %v522 = vstv %s165
    %v523 = vmul.f32 %v365, %v522
    %v524 = vmul.f32 %v366, %v522
    %v525 = vadd.f32 %v520, %v523
    %v526 = vadd.f32 %v521, %v524
    %v527 = vstv %s169
    %v528 = vmul.f32 %v414, %v527
    %v529 = vmul.f32 %v415, %v527
    %v530 = vadd.f32 %v525, %v528
    %v531 = vadd.f32 %v526, %v529
    %v532 = vstv %s173
    %v533 = vmul.f32 %v463, %v532
    %v534 = vmul.f32 %v464, %v532
    %v535 = vadd.f32 %v530, %v533
    %v536 = vadd.f32 %v531, %v534
    %v537 = vstv %s177
    %v538 = vmul.f32 %v512, %v537
    %v539 = vmul.f32 %v513, %v537
    %v540 = vadd.f32 %v535, %v538
    %v541 = vadd.f32 %v536, %v539
    %v542 = vstv %s181
    %v543 = vadd.f32 %v540, %v542
    %v544 = vadd.f32 %v541, %v542
    %v545 = vmul.f32 %v543, 0.5
    %v546 = vmul.f32 %v544, 0.5
    %v547 = vtanh.pop %v545
    %v548 = vtanh.pop %v546
    %v549 = vmul.f32 %v547, 0.5
    %v550 = vmul.f32 %v548, 0.5
    %v551 = vadd.f32 %v549, 0.5
    %v552 = vadd.f32 %v550, 0.5
    %v553 = vstv %s158
    %v554 = vmul.f32 %v267, %v553
    %v555 = vmul.f32 %v268, %v553
    %v556 = vstv %s162
    %v557 = vmul.f32 %v316, %v556
    %v558 = vmul.f32 %v317, %v556
    %v559 = vadd.f32 %v554, %v557
    %v560 = vadd.f32 %v555, %v558
    %v561 = vstv %s166
    %v562 = vmul.f32 %v365, %v561
    %v563 = vmul.f32 %v366, %v561
    %v564 = vadd.f32 %v559, %v562
    %v565 = vadd.f32 %v560, %v563
    %v566 = vstv %s170
    %v567 = vmul.f32 %v414, %v566
    %v568 = vmul.f32 %v415, %v566
    %v569 = vadd.f32 %v564, %v567
    %v570 = vadd.f32 %v565, %v568
    %v571 = vstv %s174
    %v572 = vmul.f32 %v463, %v571
    %v573 = vmul.f32 %v464, %v571
    %v574 = vadd.f32 %v569, %v572
    %v575 = vadd.f32 %v570, %v573
    %v576 = vstv %s178
    %v577 = vmul.f32 %v512, %v576
    %v578 = vmul.f32 %v513, %v576
    %v579 = vadd.f32 %v574, %v577
    %v580 = vadd.f32 %v575, %v578
    %v581 = vstv %s182
    %v582 = vadd.f32 %v579, %v581
    %v583 = vadd.f32 %v580, %v581
    %v584 = vmul.f32 %v582, 0.5
    %v585 = vmul.f32 %v583, 0.5
    %v586 = vtanh.pop %v584
    %v587 = vtanh.pop %v585
    %v588 = vmul.f32 %v586, 0.5
    %v589 = vmul.f32 %v587, 0.5
    %v590 = vadd.f32 %v588, 0.5
    %v591 = vadd.f32 %v589, 0.5
    %v592 = vstv %s159
    %v593 = vmul.f32 %v267, %v592
    %v594 = vmul.f32 %v268, %v592
    %v595 = vstv %s163
    %v596 = vmul.f32 %v316, %v595
    %v597 = vmul.f32 %v317, %v595
    %v598 = vadd.f32 %v593, %v596
    %v599 = vadd.f32 %v594, %v597
    %v600 = vstv %s167
    %v601 = vmul.f32 %v365, %v600
    %v602 = vmul.f32 %v366, %v600
    %v603 = vadd.f32 %v598, %v601
    %v604 = vadd.f32 %v599, %v602
    %v605 = vstv %s171
    %v606 = vmul.f32 %v414, %v605
    %v607 = vmul.f32 %v415, %v605
    %v608 = vadd.f32 %v603, %v606
    %v609 = vadd.f32 %v604, %v607
    %v610 = vstv %s175
    %v611 = vmul.f32 %v463, %v610
    %v612 = vmul.f32 %v464, %v610
    %v613 = vadd.f32 %v608, %v611
    %v614 = vadd.f32 %v609, %v612
    %v615 = vstv %s179
    %v616 = vmul.f32 %v512, %v615
    %v617 = vmul.f32 %v513, %v615
    %v618 = vadd.f32 %v613, %v616
    %v619 = vadd.f32 %v614, %v617
    %v620 = vstv %s183
    %v621 = vadd.f32 %v618, %v620
    %v622 = vadd.f32 %v619, %v620
    %v623 = vmul.f32 %v621, 0.5
    %v624 = vmul.f32 %v622, 0.5
    %v625 = vtanh.pop %v623
    %v626 = vtanh.pop %v624
    %v627 = vmul.f32 %v625, 0.5
    %v628 = vmul.f32 %v626, 0.5
    %v629 = vadd.f32 %v627, 0.5
    %v630 = vadd.f32 %v628, 0.5
    %v631 = vstv %s160
    %v632 = vmul.f32 %v267, %v631
    %v633 = vmul.f32 %v268, %v631
    %v634 = vstv %s164
    %v635 = vmul.f32 %v316, %v634
    %v636 = vmul.f32 %v317, %v634
    %v637 = vadd.f32 %v632, %v635
    %v638 = vadd.f32 %v633, %v636
    %v639 = vstv %s168
    %v640 = vmul.f32 %v365, %v639
    %v641 = vmul.f32 %v366, %v639
    %v642 = vadd.f32 %v637, %v640
    %v643 = vadd.f32 %v638, %v641
    %v644 = vstv %s172
    %v645 = vmul.f32 %v414, %v644
    %v646 = vmul.f32 %v415, %v644
    %v647 = vadd.f32 %v642, %v645
    %v648 = vadd.f32 %v643, %v646
    %v649 = vstv %s176
    %v650 = vmul.f32 %v463, %v649
    %v651 = vmul.f32 %v464, %v649
    %v652 = vadd.f32 %v647, %v650
    %v653 = vadd.f32 %v648, %v651
    %v654 = vstv %s180
    %v655 = vmul.f32 %v512, %v654
    %v656 = vmul.f32 %v513, %v654
    %v657 = vadd.f32 %v652, %v655
    %v658 = vadd.f32 %v653, %v656
    %v659 = vstv %s184
    %v660 = vadd.f32 %v657, %v659
    %v661 = vadd.f32 %v658, %v659
    %v662 = vmul.f32 %v660, 0.5
    %v663 = vmul.f32 %v661, 0.5
    %v664 = vtanh.pop %v662
    %v665 = vtanh.pop %v663
    %v666 = vmul.f32 %v664, 0.5
    %v667 = vmul.f32 %v665, 0.5
    %v668 = vadd.f32 %v666, 0.5
    %v669 = vadd.f32 %v667, 0.5
    %v670 = vstv %s185
    %v671 = vmul.f32 %v551, %v670
    %v672 = vmul.f32 %v552, %v670
    %v673 = vstv %s186
    %v674 = vmul.f32 %v590, %v673
    %v675 = vmul.f32 %v591, %v673
    %v676 = vadd.f32 %v671, %v674
    %v677 = vadd.f32 %v672, %v675
    %v678 = vstv %s187
    %v679 = vmul.f32 %v629, %v678
    %v680 = vmul.f32 %v630, %v678
    %v681 = vadd.f32 %v676, %v679
    %v682 = vadd.f32 %v677, %v680
    %v683 = vstv %s188
    %v684 = vmul.f32 %v668, %v683
    %v685 = vmul.f32 %v669, %v683
    %v686 = vadd.f32 %v681, %v684
    %v687 = vadd.f32 %v682, %v685
    %v688 = vstv %s189
    %v689 = vadd.f32 %v686, %v688
    %v690 = vadd.f32 %v687, %v688
    %v691 = vmul.f32 %v689, 0.5
    %v692 = vmul.f32 %v690, 0.5
    %v693 = vtanh.pop %v691
    %v694 = vtanh.pop %v692
    %v695 = vmul.f32 %v693, 0.5
    %v696 = vmul.f32 %v694, 0.5
    %v697 = vadd.f32 %v695, 0.5
    %v698 = vadd.f32 %v696, 0.5
    %699 = vst [vmem:[#allocation14] sm:$0xff] %v697
    %700 = vst [vmem:[#allocation14 + $0x8] sm:$0xff] %v698
    // Predicated region
    $region54: #{tpu_custom_call.1} parent=1 // pred_check
      _
    $region55: #{tpu_custom_call.1} parent=1 // pred_check_branch
      %702 = sbr.rel (0) target = $region57
    $region56: #{tpu_custom_call.1} parent=1 // pred_region
      %704 = vsyncadd [#allocation5], 0
      %s705 = sshll.u32 [#allocation14], 4
      %s706 = int_to_ptr.vmem [resolvable:$true] %s705
      %s707 = sshll.u32 %s7, 4
      %s708 = int_to_ptr.hbm [resolvable:$true] %s707
      %713 = dma.vmem_to_hbm [thread:$0]  %s706, 256, %s708, [#allocation5], 128, 128, 8
    $region57: #{tpu_custom_call.1} parent=1 // pred_fallthru
      _
    // Predicated region
    $region58: #{tpu_custom_call.1} parent=1 // pred_check
      _
    $region59: #{tpu_custom_call.1} parent=1 // pred_check_branch
      %715 = sbr.rel (0) target = $region61
    $region60: #{tpu_custom_call.1} parent=1 // pred_region
      %717 = dma.done [#allocation5], 256
    $region61: #{tpu_custom_call.1} parent=1 // pred_fallthru
      _
    %718 = vsyncpa [#allocation4], 1
    %719 = vsyncpa [#allocation5], 1
    %720 = vsyncpa [#allocation6], 1
    %721 = vsyncpa [#allocation8], 1
    %722 = vsyncpa [#allocation11], 1

</llo_original>
